<compile_context>
chip_gen: v5e
topology: v5e:2x2
jax: 0.10.0
libtpu: 0.0.40
codegen_flags: <defaults>
</compile_context>

<pallas_src>
import functools

import numpy as np

import jax
import jax.numpy as jnp
from jax import lax
from jax.experimental import pallas as pl
from jax.experimental.pallas import tpu as pltpu

KERNEL = 3
STRIDE = 2
PADDING = 1
OUTPUT_PADDING = 1

# (output parity, input shift) -> ConvTranspose3d kernel tap index, per spatial dim.
#   even output:  out[2j]   = x[j] * w[1]
#   odd  output:  out[2j+1] = x[j] * w[2] + x[j+1] * w[0]     (x[D] := 0)
_TAP = {(0, 0): 1, (1, 0): 2, (1, 1): 0}


# --------------------------------------------------------------------------- #
# Pallas kernel: one lane-dense GEMM tile with fused bias + ReLU.
# --------------------------------------------------------------------------- #
def _gemm_bias_relu_kernel(x_ref, w_ref, b_ref, o_ref):
    # x_ref: (TM, 8*Cin)        im2col'd input rows (K-fused over the 8 shifts)
    # w_ref: (8*Cin, 8*Coutp)   parity/shift-fused weight slab
    # b_ref: (1, 8*Coutp)       parity-tiled bias
    # o_ref: (TM, 8*Coutp)      8 parity sub-outputs concatenated on lanes
    acc = jnp.dot(x_ref[...], w_ref[...], preferred_element_type=jnp.float32)
    o_ref[...] = jnp.maximum(acc + b_ref[...], 0.0).astype(o_ref.dtype)


# --------------------------------------------------------------------------- #
# Host-side helpers.
# --------------------------------------------------------------------------- #
def _vmem_capacity_bytes():
    try:
        return int(pltpu.get_tpu_info().vmem_capacity_bytes)
    except Exception:
        return 64 * 1024 * 1024          # conservative fallback (v7x per-TC VMEM)


def _choose_tiling(rows, kdim, ncols, x_itemsize):
    """Pick the row tile TM and a VMEM limit from real per-chip VMEM capacity."""
    vmem = _vmem_capacity_bytes()
    fixed = 2 * kdim * ncols * 4 + 2 * ncols * 4        # dbl-buffered weight + bias (f32)
    per_row = 2 * (kdim + ncols) * x_itemsize           # dbl-buffered input + output rows
    if fixed + 8 * per_row > int(0.9 * vmem):
        # TODO(synk): tile the GEMM along K/N instead of failing for huge Cin*Cout.
        raise ValueError(
            f"deconv3d weight slab ({fixed} bytes double-buffered) does not fit in "
            f"VMEM ({vmem} bytes); K/N tiling of the fused GEMM is required.")
    budget = int(0.45 * vmem)                            # leave headroom for temps
    tm = (budget - fixed) // per_row
    tm = max(8, min(int(tm), 4096))                      # >~1k rows amortizes step cost
    if rows >= 64:
        # Keep >= ~8 grid steps: megacore load balance + deep DMA pipeline.
        tm = min(tm, max(8, (pl.cdiv(rows, 8) // 8) * 8))
    tm = max(8, (tm // 8) * 8)
    vmem_limit = min(int(0.85 * vmem),
                     max(32 * 1024 * 1024, 2 * (fixed + per_row * tm)))
    return tm, int(vmem_limit)


def pack_deconv3d_params(weight, bias, dtype=jnp.float32):
    """Pack ConvTranspose3d(k=3,s=2,p=1,op=1) params once, host-side (numpy).

    weight: (Cin, Cout, 3, 3, 3)  PyTorch ConvTranspose3d layout
    bias  : (Cout,)
    returns: w_packed (8*Cin, 8*Coutp), b_packed (1, 8*Coutp)  with Coutp = ceil16(Cout)
    """
    weight = np.asarray(weight, np.float32)
    bias = np.asarray(bias, np.float32)
    cin, cout = weight.shape[:2]
    assert weight.shape[2:] == (KERNEL,) * 3, (
        "kernel is specialized to kernel=3, stride=2, padding=1, output_padding=1")
    coutp = -(-cout // 16) * 16                         # 8*Coutp is a multiple of 128
    ncols = 8 * coutp

    w_packed = np.zeros((8 * cin, ncols), np.float32)
    for sd in (0, 1):
        for sh in (0, 1):
            for sw in (0, 1):
                s_idx = sd * 4 + sh * 2 + sw
                for pd in (0, 1):
                    kd = _TAP.get((pd, sd))
                    if kd is None:
                        continue
                    for ph in (0, 1):
                        kh = _TAP.get((ph, sh))
                        if kh is None:
                            continue
                        for pw in (0, 1):
                            kw = _TAP.get((pw, sw))
                            if kw is None:
                                continue
                            p_idx = pd * 4 + ph * 2 + pw
                            w_packed[s_idx * cin:(s_idx + 1) * cin,
                                     p_idx * coutp:p_idx * coutp + cout] = \
                                weight[:, :, kd, kh, kw]

    b_packed = np.zeros((1, ncols), np.float32)
    for p_idx in range(8):
        b_packed[0, p_idx * coutp:p_idx * coutp + cout] = bias

    return jnp.asarray(w_packed, dtype), jnp.asarray(b_packed, jnp.float32)


# --------------------------------------------------------------------------- #
# Forward pass.
# --------------------------------------------------------------------------- #
def _deconv3d_block_impl(x_ncdhw, w_packed, b_packed, cout):
    n, cin, d, h, w = x_ncdhw.shape
    kdim, ncols = w_packed.shape
    assert kdim == 8 * cin, "packed weight does not match Cin"
    coutp = ncols // 8
    od, oh, ow = STRIDE * d, STRIDE * h, STRIDE * w
    dtype = x_ncdhw.dtype

    # ---- im2col over the 2x2x2 stride-2 shift window (cheap XLA layout op) -------
    x = jnp.transpose(x_ncdhw, (0, 2, 3, 4, 1))                      # NDHWC
    x_p = jnp.pad(x, ((0, 0), (0, 1), (0, 1), (0, 1), (0, 0)))       # +1 zero halo
    cols = []
    for sd in (0, 1):
        for sh in (0, 1):
            for sw in (0, 1):
                cols.append(x_p[:, sd:sd + d, sh:sh + h, sw:sw + w, :])
    x_cols = jnp.concatenate(cols, axis=-1).reshape(n * d * h * w, kdim)

    rows = n * d * h * w
    tm, vmem_limit = _choose_tiling(rows, kdim, ncols, jnp.dtype(dtype).itemsize)
    rows_p = pl.cdiv(rows, tm) * tm
    if rows_p != rows:
        x_cols = jnp.pad(x_cols, ((0, rows_p - rows), (0, 0)))

    out = pl.pallas_call(
        _gemm_bias_relu_kernel,
        out_shape=jax.ShapeDtypeStruct((rows_p, ncols), dtype),
        grid_spec=pltpu.PrefetchScalarGridSpec(
            num_scalar_prefetch=0,
            grid=(rows_p // tm,),
            in_specs=[
                pl.BlockSpec((tm, kdim), lambda i: (i, 0)),
                pl.BlockSpec((kdim, ncols), lambda i: (0, 0)),
                pl.BlockSpec((1, ncols), lambda i: (0, 0)),
            ],
            out_specs=pl.BlockSpec((tm, ncols), lambda i: (i, 0)),
        ),
        compiler_params=pltpu.CompilerParams(
            dimension_semantics=("parallel",),
            vmem_limit_bytes=vmem_limit),
    )(x_cols, w_packed, b_packed)

    # ---- strip channel padding FIRST, then un-interleave the 8 parity sub-grids --
    out = out[:rows].reshape(n, d, h, w, 2, 2, 2, coutp)[..., :cout]
    out = jnp.transpose(out, (0, 1, 4, 2, 5, 3, 6, 7)).reshape(n, od, oh, ow, cout)
    return jnp.transpose(out, (0, 4, 1, 2, 3))                        # back to NCDHW


deconv3d_block = jax.jit(_deconv3d_block_impl, static_argnums=(3,))


# --------------------------------------------------------------------------- #
# Pure-JAX reference (XLA conv with lhs dilation), PyTorch semantics.
# --------------------------------------------------------------------------- #
def _reference(x_ncdhw, weight, bias):
    x = jnp.transpose(x_ncdhw, (0, 2, 3, 4, 1))
    w_eff = jnp.transpose(jnp.flip(weight, axis=(2, 3, 4)), (2, 3, 4, 0, 1))
    pad_lo = KERNEL - 1 - PADDING
    pad_hi = KERNEL - 1 - PADDING + OUTPUT_PADDING
    y = lax.conv_general_dilated(
        x, w_eff, window_strides=(1, 1, 1),
        padding=[(pad_lo, pad_hi)] * 3, lhs_dilation=(STRIDE,) * 3,
        dimension_numbers=('NDHWC', 'DHWIO', 'NDHWC'))
    y = jnp.maximum(y + bias, 0.0)
    return jnp.transpose(y, (0, 4, 1, 2, 3))


if __name__ == "__main__":
    key = jax.random.PRNGKey(0)
    k1, k2, k3 = jax.random.split(key, 3)

    N, CIN, COUT, D, H, W = 2, 4, 8, 16, 16, 16
    x = jax.random.normal(k1, (N, CIN, D, H, W), jnp.float32)
    weight = 0.1 * jax.random.normal(k2, (CIN, COUT, KERNEL, KERNEL, KERNEL),
                                     jnp.float32)
    bias = 0.1 * jax.random.normal(k3, (COUT,), jnp.float32)

    # Pack parameters once, host-side (outside the jitted per-call path).
    w_packed, b_packed = pack_deconv3d_params(weight, bias)

    out = jax.block_until_ready(deconv3d_block(x, w_packed, b_packed, COUT))
    assert out.shape == (N, COUT, STRIDE * D, STRIDE * H, STRIDE * W), out.shape

    ref = _reference(x, weight, bias)
    max_err = float(jnp.max(jnp.abs(out - ref)))
    assert jnp.allclose(out, ref, atol=5e-4, rtol=5e-4), max_err

    print("KERNEL_OK")
</pallas_src>

<mosaic_0001>
module attributes {stable_mosaic.version = 11 : i64} {
  func.func @_gemm_bias_relu_kernel(%arg0: i32, %arg1: memref<1024x32xf32, #tpu.memory_space<vmem>>, %arg2: memref<32x128xf32, #tpu.memory_space<vmem>>, %arg3: memref<1x128xf32, #tpu.memory_space<vmem>>, %arg4: memref<1024x128xf32, #tpu.memory_space<vmem>>) attributes {dimension_semantics = [#tpu.dimension_semantics<parallel>], iteration_bounds = array<i64: 8>, scalar_prefetch = 0 : i64, scratch_operands = 0 : i64, tpu.core_type = #tpu.core_type<tc>, window_params = [{transform_indices = @transform_0, window_bounds = array<i64: 1024, 32>}, {pipeline_mode = #tpu.pipeline_mode<synchronous>, transform_indices = @transform_1, window_bounds = array<i64: 32, 128>}, {pipeline_mode = #tpu.pipeline_mode<synchronous>, transform_indices = @transform_2, window_bounds = array<i64: 1, 128>}, {transform_indices = @transform_3, window_bounds = array<i64: 1024, 128>}]} {
    %c0 = arith.constant 0 : index
    %c0_0 = arith.constant 0 : index
    %0 = vector.load %arg1[%c0, %c0_0] : memref<1024x32xf32, #tpu.memory_space<vmem>>, vector<1024x32xf32>
    %c0_1 = arith.constant 0 : index
    %c0_2 = arith.constant 0 : index
    %1 = vector.load %arg2[%c0_1, %c0_2] : memref<32x128xf32, #tpu.memory_space<vmem>>, vector<32x128xf32>
    %cst = arith.constant dense<0.000000e+00> : vector<1024x128xf32>
    %2 = tpu.matmul %0, %1, %cst {dimension_numbers = #tpu.dot_dimension_numbers<[1], [0], [0], [1], [0, 0, 1, 1], [], []>} : vector<1024x32xf32>, vector<32x128xf32>, vector<1024x128xf32> -> vector<1024x128xf32>
    %c0_3 = arith.constant 0 : index
    %c0_4 = arith.constant 0 : index
    %3 = vector.load %arg3[%c0_3, %c0_4] : memref<1x128xf32, #tpu.memory_space<vmem>>, vector<1x128xf32>
    %4 = vector.broadcast %3 : vector<1x128xf32> to vector<1024x128xf32>
    %5 = arith.addf %2, %4 : vector<1024x128xf32>
    %cst_5 = arith.constant 0.000000e+00 : f32
    %6 = vector.broadcast %cst_5 : f32 to vector<1024x128xf32>
    %7 = arith.maximumf %5, %6 : vector<1024x128xf32>
    %c0_6 = arith.constant 0 : index
    %c0_7 = arith.constant 0 : index
    %8 = vector.load %arg4[%c0_6, %c0_7] : memref<1024x128xf32, #tpu.memory_space<vmem>>, vector<1024x128xf32>
    tpu.vector_store %arg4[%c0_6, %c0_7], %7 {strides = array<i32>} : memref<1024x128xf32, #tpu.memory_space<vmem>>, vector<1024x128xf32>,
    return
  }
  func.func @transform_0(%arg0: i32) -> (i32, i32) {
    %c0_i32 = arith.constant 0 : i32
    %c0_i32_0 = arith.constant 0 : i32
    return %arg0, %c0_i32 : i32, i32
  }
  func.func @transform_1(%arg0: i32) -> (i32, i32) {
    %c0_i32 = arith.constant 0 : i32
    %c0_i32_0 = arith.constant 0 : i32
    %c0_i32_1 = arith.constant 0 : i32
    return %c0_i32, %c0_i32_0 : i32, i32
  }
  func.func @transform_2(%arg0: i32) -> (i32, i32) {
    %c0_i32 = arith.constant 0 : i32
    %c0_i32_0 = arith.constant 0 : i32
    %c0_i32_1 = arith.constant 0 : i32
    return %c0_i32, %c0_i32_0 : i32, i32
  }
  func.func @transform_3(%arg0: i32) -> (i32, i32) {
    %c0_i32 = arith.constant 0 : i32
    %c0_i32_0 = arith.constant 0 : i32
    return %arg0, %c0_i32 : i32, i32
  }
}

</mosaic_0001>

<llo_original>
// kernel: _deconv3d_block_impl.1
$region0: #{_deconv3d_block_impl.1}
  #allocation0 [shape = 'u32[]', space=smem, size = 0x4, offset = 0x4, fixed_abs, tag = 'smem constant byte address 0x4 - core index']
  #allocation1 [shape = 'u32[72,128]{1,0:T(1,128)}', space=vmem, size = 0x9000, scoped, tag = 'internal scratch']
  %s0 = inlined_call_operand.vmem [shape: f32[8192,32], index: 0, kind: input, shape index: {}]
  %s1 = inlined_call_operand.vmem [shape: f32[32,128], index: 1, kind: input, shape index: {}]
  %s2 = inlined_call_operand.vmem [shape: f32[1,128], index: 2, kind: input, shape index: {}]
  %s3 = inlined_call_operand.vmem [shape: f32[8192,128], index: 3, kind: output, shape index: {}]
  %s4 = sld [smem:[#allocation0]]
  $region45: #{_deconv3d_block_impl.1} parent=0
    _
  %s6 = ssub.s32 1, %s4
  %s7 = scalar_select 0, %s6, %s4
  loop: start=0, step=1, limit=10
  $region2: #{_deconv3d_block_impl.1} parent=0 // loop_pre_header
    _
  $region3: #{_deconv3d_block_impl.1} parent=0 // loop_header
    %s9 = sphi 0, %s13
    %p10 = scmp.ge.s32.totalorder %s9, 10
    %s19 = sphi 0, %s21
    %s22 = sphi 0, %s19
    %s23 = sphi 0, %s22
    %s39 = sphi 0, %s23
    %s43 = sphi 0, %s43
    %s45 = sphi 0, %s43
    %s46 = sphi 0, %s45
    %s60 = sphi 0, %s46
    %s64 = sphi 0, %s64
    %s66 = sphi 0, %s64
    %s67 = sphi 0, %s66
    %s81 = sphi 0, %s67
    %s87 = sphi 0, %s89
    %s90 = sphi 0, %s87
    %s91 = sphi 0, %s90
    %s107 = sphi 0, %s91
  $region4: #{_deconv3d_block_impl.1} parent=0 // loop_header_branch
    %12 = sbr.rel (%p10) target = $region8
  $region5: #{_deconv3d_block_impl.1} parent=0 // loop_body
    %s14 = ssub.s32 %s9, 1
    %s15 = ssub.s32 %s9, 2
    %s16 = sadd.s32 %s9, 1
    %s17 = ssub.s32 %s9, %s16
    %p18 = scmp.eq.s32.totalorder %s17, 0
    %s20 = sadd.s32 %s19, 1
    %s21 = scalar_select %p18, %s19, %s20
    %p24 = pneg %p18
    %p25 = scmp.eq.s32.totalorder %s9, 7
    %p26 = por %p24, %p25
    %p27 = scmp.ne.s32.totalorder %s19, %s22
    %p28 = scmp.eq.s32.totalorder %s9, 0
    %p29 = por %p27, %p28
    %p30 = scmp.ne.s32.totalorder %s19, %s22
    %p31 = scmp.eq.s32.totalorder %s14, 7
    %p32 = por %p30, %p31
    %p33 = scmp.ne.s32.totalorder %s22, %s23
    %p34 = scmp.eq.s32.totalorder %s14, 0
    %p35 = por %p33, %p34
    %p36 = scmp.ne.s32.totalorder %s22, %s23
    %p37 = scmp.eq.s32.totalorder %s15, 7
    %p38 = por %p36, %p37
    %p40 = scmp.ne.s32.totalorder %s23, %s39
    %p41 = scmp.eq.s32.totalorder %s15, 0
    %p42 = por %p40, %p41
    %s44 = sadd.s32 %s43, 1
    %p47 = scmp.eq.s32.totalorder %s9, 7
    %p48 = scmp.ne.s32.totalorder %s43, %s45
    %p49 = scmp.eq.s32.totalorder %s9, 0
    %p50 = por %p48, %p49
    %p51 = scmp.ne.s32.totalorder %s43, %s45
    %p52 = scmp.eq.s32.totalorder %s14, 7
    %p53 = por %p51, %p52
    %p54 = scmp.ne.s32.totalorder %s45, %s46
    %p55 = scmp.eq.s32.totalorder %s14, 0
    %p56 = por %p54, %p55
    %p57 = scmp.ne.s32.totalorder %s45, %s46
    %p58 = scmp.eq.s32.totalorder %s15, 7
    %p59 = por %p57, %p58
    %p61 = scmp.ne.s32.totalorder %s46, %s60
    %p62 = scmp.eq.s32.totalorder %s15, 0
    %p63 = por %p61, %p62
    %s65 = sadd.s32 %s64, 1
    %p68 = scmp.eq.s32.totalorder %s9, 7
    %p69 = scmp.ne.s32.totalorder %s64, %s66
    %p70 = scmp.eq.s32.totalorder %s9, 0
    %p71 = por %p69, %p70
    %p72 = scmp.ne.s32.totalorder %s64, %s66
    %p73 = scmp.eq.s32.totalorder %s14, 7
    %p74 = por %p72, %p73
    %p75 = scmp.ne.s32.totalorder %s66, %s67
    %p76 = scmp.eq.s32.totalorder %s14, 0
    %p77 = por %p75, %p76
    %p78 = scmp.ne.s32.totalorder %s66, %s67
    %p79 = scmp.eq.s32.totalorder %s15, 7
    %p80 = por %p78, %p79
    %p82 = scmp.ne.s32.totalorder %s67, %s81
    %p83 = scmp.eq.s32.totalorder %s15, 0
    %p84 = por %p82, %p83
    %s85 = ssub.s32 %s9, %s16
    %p86 = scmp.eq.s32.totalorder %s85, 0
    %s88 = sadd.s32 %s87, 1
    %s89 = scalar_select %p86, %s87, %s88
    %p92 = pneg %p86
    %p93 = scmp.eq.s32.totalorder %s9, 7
    %p94 = por %p92, %p93
    %p95 = scmp.ne.s32.totalorder %s87, %s90
    %p96 = scmp.eq.s32.totalorder %s9, 0
    %p97 = por %p95, %p96
    %p98 = scmp.ne.s32.totalorder %s87, %s90
    %p99 = scmp.eq.s32.totalorder %s14, 7
    %p100 = por %p98, %p99
    %p101 = scmp.ne.s32.totalorder %s90, %s91
    %p102 = scmp.eq.s32.totalorder %s14, 0
    %p103 = por %p101, %p102
    %p104 = scmp.ne.s32.totalorder %s90, %s91
    %p105 = scmp.eq.s32.totalorder %s15, 7
    %p106 = por %p104, %p105
    %p108 = scmp.ne.s32.totalorder %s91, %s107
    %p109 = scmp.eq.s32.totalorder %s15, 0
    %p110 = por %p108, %p109
    %p111 = scmp.le.s32.totalorder 1, %s9
    %p112 = scmp.lt.s32.totalorder %s9, 9
    %p113 = pnand %p111, %p112
    %p114 = pneg %p113
    // Predicated region
    $region9: #{_deconv3d_block_impl.1} parent=5 // pred_check
      _
    $region10: #{_deconv3d_block_impl.1} parent=5 // pred_check_branch
      %116 = sbr.rel (%p113) target = $region12
    $region11: #{_deconv3d_block_impl.1} parent=5 // pred_region
      %s117 = ssub.s32 %s9, 1
      // Predicated region
      $region13: #{_deconv3d_block_impl.1} parent=11 // pred_check
        %p118 = pneg %p56
      $region14: #{_deconv3d_block_impl.1} parent=11 // pred_check_branch
        %120 = sbr.rel (%p118) target = $region16
      $region15: #{_deconv3d_block_impl.1} parent=11 // pred_region
        _
      $region16: #{_deconv3d_block_impl.1} parent=11 // pred_fallthru
        _
      // Predicated region
      $region17: #{_deconv3d_block_impl.1} parent=11 // pred_check
        %p121 = pneg %p77
      $region18: #{_deconv3d_block_impl.1} parent=11 // pred_check_branch
        %123 = sbr.rel (%p121) target = $region20
      $region19: #{_deconv3d_block_impl.1} parent=11 // pred_region
        _
      $region20: #{_deconv3d_block_impl.1} parent=11 // pred_fallthru
        _
    $region12: #{_deconv3d_block_impl.1} parent=5 // pred_fallthru
      _
    %p124 = scmp.lt.s32.totalorder %s9, 8
    // Predicated region
    $region21: #{_deconv3d_block_impl.1} parent=5 // pred_check
      %p125 = pneg %p124
    $region22: #{_deconv3d_block_impl.1} parent=5 // pred_check_branch
      %127 = sbr.rel (%p125) target = $region24
    $region23: #{_deconv3d_block_impl.1} parent=5 // pred_region
      // Predicated region
      $region25: #{_deconv3d_block_impl.1} parent=23 // pred_check
        %p128 = pneg %p29
      $region26: #{_deconv3d_block_impl.1} parent=23 // pred_check_branch
        %130 = sbr.rel (%p128) target = $region28
      $region27: #{_deconv3d_block_impl.1} parent=23 // pred_region
        %s131 = smul.u32 128, %s9
        %p132 = scmp.lt.s32.totalorder %s131, 1023
        %s133 = scalar_select %p132, %s131, 1023
        %s134 = smul.addr %s133, 8
        %s135 = scalar_lea.vmem %s0, %s134
        %s136 = smul.u32 128, %s9
      $region28: #{_deconv3d_block_impl.1} parent=23 // pred_fallthru
        _
    $region24: #{_deconv3d_block_impl.1} parent=5 // pred_fallthru
      _
    %p137 = scmp.le.s32.totalorder 1, %s9
    %p138 = scmp.lt.s32.totalorder %s9, 9
    %p139 = pnand %p137, %p138
    %p140 = pneg %p139
    // Predicated region
    $region29: #{_deconv3d_block_impl.1} parent=5 // pred_check
      _
    $region30: #{_deconv3d_block_impl.1} parent=5 // pred_check_branch
      %142 = sbr.rel (%p139) target = $region32
    $region31: #{_deconv3d_block_impl.1} parent=5 // pred_region
      %s143 = ssub.s32 %s9, 1
      %s144 = smul.u32 128, %s14
      %p145 = scmp.lt.s32.totalorder %s144, 1023
      %s146 = scalar_select %p145, %s144, 1023
      %s147 = smul.addr %s146, 8
      %s148 = scalar_lea.vmem %s0, %s147
      %p149 = pneg %p35
      %p150 = pneg %p32
      %p151 = pneg %p56
      %p152 = pneg %p53
      %p153 = pneg %p77
      %p154 = pneg %p74
      %p155 = pneg %p103
      %p156 = pneg %p100
      %s157 = smul.u32 128, %s14
      %p158 = scmp.lt.s32.totalorder %s157, 1023
      %s159 = scalar_select %p158, %s157, 1023
      %s160 = smul.addr %s159, 8
      %s161 = scalar_lea.vmem %s3, %s160
      %s162 = smul.u32 128, %s14
      %p163 = scmp.lt.s32.totalorder %s162, 1023
      %s164 = scalar_select %p163, %s162, 1023
      %s165 = smul.addr %s164, 8
      %s166 = scalar_lea.vmem %s0, %s165
      %s167 = smul.u32 128, %s14
      %s168 = smul.u32 128, %s14
      %p169 = scmp.lt.s32.totalorder %s168, 1023
      %s170 = scalar_select %p169, %s168, 1023
      %s171 = smul.addr %s170, 8
      %s172 = scalar_lea.vmem %s3, %s171
      %s173 = smul.u32 128, %s14
      %v174 = vld [vmem:[%s166] sm:$0xff]
      %v175 = vld [vmem:[%s166 + $0x8] sm:$0xff]
      %v176 = vld [vmem:[%s166 + $0x10] sm:$0xff]
      %v177 = vld [vmem:[%s166 + $0x18] sm:$0xff]
      %v178 = vld [vmem:[%s166 + $0x20] sm:$0xff]
      %v179 = vld [vmem:[%s166 + $0x28] sm:$0xff]
      %v180 = vld [vmem:[%s166 + $0x30] sm:$0xff]
      %v181 = vld [vmem:[%s166 + $0x38] sm:$0xff]
      %v182 = vld [vmem:[%s166 + $0x40] sm:$0xff]
      %v183 = vld [vmem:[%s166 + $0x48] sm:$0xff]
      %v184 = vld [vmem:[%s166 + $0x50] sm:$0xff]
      %v185 = vld [vmem:[%s166 + $0x58] sm:$0xff]
      %v186 = vld [vmem:[%s166 + $0x60] sm:$0xff]
      %v187 = vld [vmem:[%s166 + $0x68] sm:$0xff]
      %v188 = vld [vmem:[%s166 + $0x70] sm:$0xff]
      %v189 = vld [vmem:[%s166 + $0x78] sm:$0xff]
      %v190 = vld [vmem:[%s166 + $0x80] sm:$0xff]
      %v191 = vld [vmem:[%s166 + $0x88] sm:$0xff]
      %v192 = vld [vmem:[%s166 + $0x90] sm:$0xff]
      %v193 = vld [vmem:[%s166 + $0x98] sm:$0xff]
      %v194 = vld [vmem:[%s166 + $0xa0] sm:$0xff]
      %v195 = vld [vmem:[%s166 + $0xa8] sm:$0xff]
      %v196 = vld [vmem:[%s166 + $0xb0] sm:$0xff]
      %v197 = vld [vmem:[%s166 + $0xb8] sm:$0xff]
      %v198 = vld [vmem:[%s166 + $0xc0] sm:$0xff]
      %v199 = vld [vmem:[%s166 + $0xc8] sm:$0xff]
      %v200 = vld [vmem:[%s166 + $0xd0] sm:$0xff]
      %v201 = vld [vmem:[%s166 + $0xd8] sm:$0xff]
      %v202 = vld [vmem:[%s166 + $0xe0] sm:$0xff]
      %v203 = vld [vmem:[%s166 + $0xe8] sm:$0xff]
      %v204 = vld [vmem:[%s166 + $0xf0] sm:$0xff]
      %v205 = vld [vmem:[%s166 + $0xf8] sm:$0xff]
      %v206 = vld [vmem:[%s166 + $0x100] sm:$0xff]
      %v207 = vld [vmem:[%s166 + $0x108] sm:$0xff]
      %v208 = vld [vmem:[%s166 + $0x110] sm:$0xff]
      %v209 = vld [vmem:[%s166 + $0x118] sm:$0xff]
      %v210 = vld [vmem:[%s166 + $0x120] sm:$0xff]
      %v211 = vld [vmem:[%s166 + $0x128] sm:$0xff]
      %v212 = vld [vmem:[%s166 + $0x130] sm:$0xff]
      %v213 = vld [vmem:[%s166 + $0x138] sm:$0xff]
      %v214 = vld [vmem:[%s166 + $0x140] sm:$0xff]
      %v215 = vld [vmem:[%s166 + $0x148] sm:$0xff]
      %v216 = vld [vmem:[%s166 + $0x150] sm:$0xff]
      %v217 = vld [vmem:[%s166 + $0x158] sm:$0xff]
      %v218 = vld [vmem:[%s166 + $0x160] sm:$0xff]
      %v219 = vld [vmem:[%s166 + $0x168] sm:$0xff]
      %v220 = vld [vmem:[%s166 + $0x170] sm:$0xff]
      %v221 = vld [vmem:[%s166 + $0x178] sm:$0xff]
      %v222 = vld [vmem:[%s166 + $0x180] sm:$0xff]
      %v223 = vld [vmem:[%s166 + $0x188] sm:$0xff]
      %v224 = vld [vmem:[%s166 + $0x190] sm:$0xff]
      %v225 = vld [vmem:[%s166 + $0x198] sm:$0xff]
      %v226 = vld [vmem:[%s166 + $0x1a0] sm:$0xff]
      %v227 = vld [vmem:[%s166 + $0x1a8] sm:$0xff]
      %v228 = vld [vmem:[%s166 + $0x1b0] sm:$0xff]
      %v229 = vld [vmem:[%s166 + $0x1b8] sm:$0xff]
      %v230 = vld [vmem:[%s166 + $0x1c0] sm:$0xff]
      %v231 = vld [vmem:[%s166 + $0x1c8] sm:$0xff]
      %v232 = vld [vmem:[%s166 + $0x1d0] sm:$0xff]
      %v233 = vld [vmem:[%s166 + $0x1d8] sm:$0xff]
      %v234 = vld [vmem:[%s166 + $0x1e0] sm:$0xff]
      %v235 = vld [vmem:[%s166 + $0x1e8] sm:$0xff]
      %v236 = vld [vmem:[%s166 + $0x1f0] sm:$0xff]
      %v237 = vld [vmem:[%s166 + $0x1f8] sm:$0xff]
      %v238 = vld [vmem:[%s166 + $0x200] sm:$0xff]
      %v239 = vld [vmem:[%s166 + $0x208] sm:$0xff]
      %v240 = vld [vmem:[%s166 + $0x210] sm:$0xff]
      %v241 = vld [vmem:[%s166 + $0x218] sm:$0xff]
      %v242 = vld [vmem:[%s166 + $0x220] sm:$0xff]
      %v243 = vld [vmem:[%s166 + $0x228] sm:$0xff]
      %v244 = vld [vmem:[%s166 + $0x230] sm:$0xff]
      %v245 = vld [vmem:[%s166 + $0x238] sm:$0xff]
      %v246 = vld [vmem:[%s166 + $0x240] sm:$0xff]
      %v247 = vld [vmem:[%s166 + $0x248] sm:$0xff]
      %v248 = vld [vmem:[%s166 + $0x250] sm:$0xff]
      %v249 = vld [vmem:[%s166 + $0x258] sm:$0xff]
      %v250 = vld [vmem:[%s166 + $0x260] sm:$0xff]
      %v251 = vld [vmem:[%s166 + $0x268] sm:$0xff]
      %v252 = vld [vmem:[%s166 + $0x270] sm:$0xff]
      %v253 = vld [vmem:[%s166 + $0x278] sm:$0xff]
      %v254 = vld [vmem:[%s166 + $0x280] sm:$0xff]
      %v255 = vld [vmem:[%s166 + $0x288] sm:$0xff]
      %v256 = vld [vmem:[%s166 + $0x290] sm:$0xff]
      %v257 = vld [vmem:[%s166 + $0x298] sm:$0xff]
      %v258 = vld [vmem:[%s166 + $0x2a0] sm:$0xff]
      %v259 = vld [vmem:[%s166 + $0x2a8] sm:$0xff]
      %v260 = vld [vmem:[%s166 + $0x2b0] sm:$0xff]
      %v261 = vld [vmem:[%s166 + $0x2b8] sm:$0xff]
      %v262 = vld [vmem:[%s166 + $0x2c0] sm:$0xff]
      %v263 = vld [vmem:[%s166 + $0x2c8] sm:$0xff]
      %v264 = vld [vmem:[%s166 + $0x2d0] sm:$0xff]
      %v265 = vld [vmem:[%s166 + $0x2d8] sm:$0xff]
      %v266 = vld [vmem:[%s166 + $0x2e0] sm:$0xff]
      %v267 = vld [vmem:[%s166 + $0x2e8] sm:$0xff]
      %v268 = vld [vmem:[%s166 + $0x2f0] sm:$0xff]
      %v269 = vld [vmem:[%s166 + $0x2f8] sm:$0xff]
      %v270 = vld [vmem:[%s166 + $0x300] sm:$0xff]
      %v271 = vld [vmem:[%s166 + $0x308] sm:$0xff]
      %v272 = vld [vmem:[%s166 + $0x310] sm:$0xff]
      %v273 = vld [vmem:[%s166 + $0x318] sm:$0xff]
      %v274 = vld [vmem:[%s166 + $0x320] sm:$0xff]
      %v275 = vld [vmem:[%s166 + $0x328] sm:$0xff]
      %v276 = vld [vmem:[%s166 + $0x330] sm:$0xff]
      %v277 = vld [vmem:[%s166 + $0x338] sm:$0xff]
      %v278 = vld [vmem:[%s166 + $0x340] sm:$0xff]
      %v279 = vld [vmem:[%s166 + $0x348] sm:$0xff]
      %v280 = vld [vmem:[%s166 + $0x350] sm:$0xff]
      %v281 = vld [vmem:[%s166 + $0x358] sm:$0xff]
      %v282 = vld [vmem:[%s166 + $0x360] sm:$0xff]
      %v283 = vld [vmem:[%s166 + $0x368] sm:$0xff]
      %v284 = vld [vmem:[%s166 + $0x370] sm:$0xff]
      %v285 = vld [vmem:[%s166 + $0x378] sm:$0xff]
      %v286 = vld [vmem:[%s166 + $0x380] sm:$0xff]
      %v287 = vld [vmem:[%s166 + $0x388] sm:$0xff]
      %v288 = vld [vmem:[%s166 + $0x390] sm:$0xff]
      %v289 = vld [vmem:[%s166 + $0x398] sm:$0xff]
      %v290 = vld [vmem:[%s166 + $0x3a0] sm:$0xff]
      %v291 = vld [vmem:[%s166 + $0x3a8] sm:$0xff]
      %v292 = vld [vmem:[%s166 + $0x3b0] sm:$0xff]
      %v293 = vld [vmem:[%s166 + $0x3b8] sm:$0xff]
      %v294 = vld [vmem:[%s166 + $0x3c0] sm:$0xff]
      %v295 = vld [vmem:[%s166 + $0x3c8] sm:$0xff]
      %v296 = vld [vmem:[%s166 + $0x3d0] sm:$0xff]
      %v297 = vld [vmem:[%s166 + $0x3d8] sm:$0xff]
      %v298 = vld [vmem:[%s166 + $0x3e0] sm:$0xff]
      %v299 = vld [vmem:[%s166 + $0x3e8] sm:$0xff]
      %v300 = vld [vmem:[%s166 + $0x3f0] sm:$0xff]
      %v301 = vld [vmem:[%s166 + $0x3f8] sm:$0xff]
      %v302 = vld [vmem:[%s1] sm:$0xff]
      %v303 = vld [vmem:[%s1 + $0x8] sm:$0xff]
      %v304 = vld [vmem:[%s1 + $0x10] sm:$0xff]
      %v305 = vld [vmem:[%s1 + $0x18] sm:$0xff]
      %v306 = vld [vmem:[%s2] sm:$0x1]
      %v308 = vperm.slane %v306, 0
      %vm310 = vcmask 261120
      %v312 = vsel %vm310, %v174, 0
      %v315 = vsel %vm310, %v175, 0
      %v318 = vsel %vm310, %v176, 0
      %v321 = vsel %vm310, %v177, 0
      %v324 = vsel %vm310, %v178, 0
      %v327 = vsel %vm310, %v179, 0
      %v330 = vsel %vm310, %v180, 0
      %v333 = vsel %vm310, %v181, 0
      %v336 = vsel %vm310, %v182, 0
      %v339 = vsel %vm310, %v183, 0
      %v342 = vsel %vm310, %v184, 0
      %v345 = vsel %vm310, %v185, 0
      %v348 = vsel %vm310, %v186, 0
      %v351 = vsel %vm310, %v187, 0
      %v354 = vsel %vm310, %v188, 0
      %v357 = vsel %vm310, %v189, 0
      %v360 = vsel %vm310, %v190, 0
      %v363 = vsel %vm310, %v191, 0
      %v366 = vsel %vm310, %v192, 0
      %v369 = vsel %vm310, %v193, 0
      %v372 = vsel %vm310, %v194, 0
      %v375 = vsel %vm310, %v195, 0
      %v378 = vsel %vm310, %v196, 0
      %v381 = vsel %vm310, %v197, 0
      %v384 = vsel %vm310, %v198, 0
      %v387 = vsel %vm310, %v199, 0
      %v390 = vsel %vm310, %v200, 0
      %v393 = vsel %vm310, %v201, 0
      %v396 = vsel %vm310, %v202, 0
      %v399 = vsel %vm310, %v203, 0
      %v402 = vsel %vm310, %v204, 0
      %v405 = vsel %vm310, %v205, 0
      %v408 = vsel %vm310, %v206, 0
      %v411 = vsel %vm310, %v207, 0
      %v414 = vsel %vm310, %v208, 0
      %v417 = vsel %vm310, %v209, 0
      %v420 = vsel %vm310, %v210, 0
      %v423 = vsel %vm310, %v211, 0
      %v426 = vsel %vm310, %v212, 0
      %v429 = vsel %vm310, %v213, 0
      %v432 = vsel %vm310, %v214, 0
      %v435 = vsel %vm310, %v215, 0
      %v438 = vsel %vm310, %v216, 0
      %v441 = vsel %vm310, %v217, 0
      %v444 = vsel %vm310, %v218, 0
      %v447 = vsel %vm310, %v219, 0
      %v450 = vsel %vm310, %v220, 0
      %v453 = vsel %vm310, %v221, 0
      %v456 = vsel %vm310, %v222, 0
      %v459 = vsel %vm310, %v223, 0
      %v462 = vsel %vm310, %v224, 0
      %v465 = vsel %vm310, %v225, 0
      %v468 = vsel %vm310, %v226, 0
      %v471 = vsel %vm310, %v227, 0
      %v474 = vsel %vm310, %v228, 0
      %v477 = vsel %vm310, %v229, 0
      %v480 = vsel %vm310, %v230, 0
      %v483 = vsel %vm310, %v231, 0
      %v486 = vsel %vm310, %v232, 0
      %v489 = vsel %vm310, %v233, 0
      %v492 = vsel %vm310, %v234, 0
      %v495 = vsel %vm310, %v235, 0
      %v498 = vsel %vm310, %v236, 0
      %v501 = vsel %vm310, %v237, 0
      %v504 = vsel %vm310, %v238, 0
      %v507 = vsel %vm310, %v239, 0
      %v510 = vsel %vm310, %v240, 0
      %v513 = vsel %vm310, %v241, 0
      %v516 = vsel %vm310, %v242, 0
      %v519 = vsel %vm310, %v243, 0
      %v522 = vsel %vm310, %v244, 0
      %v525 = vsel %vm310, %v245, 0
      %v528 = vsel %vm310, %v246, 0
      %v531 = vsel %vm310, %v247, 0
      %v534 = vsel %vm310, %v248, 0
      %v537 = vsel %vm310, %v249, 0
      %v540 = vsel %vm310, %v250, 0
      %v543 = vsel %vm310, %v251, 0
      %v546 = vsel %vm310, %v252, 0
      %v549 = vsel %vm310, %v253, 0
      %v552 = vsel %vm310, %v254, 0
      %v555 = vsel %vm310, %v255, 0
      %v558 = vsel %vm310, %v256, 0
      %v561 = vsel %vm310, %v257, 0
      %v564 = vsel %vm310, %v258, 0
      %v567 = vsel %vm310, %v259, 0
      %v570 = vsel %vm310, %v260, 0
      %v573 = vsel %vm310, %v261, 0
      %v576 = vsel %vm310, %v262, 0
      %v579 = vsel %vm310, %v263, 0
      %v582 = vsel %vm310, %v264, 0
      %v585 = vsel %vm310, %v265, 0
      %v588 = vsel %vm310, %v266, 0
      %v591 = vsel %vm310, %v267, 0
      %v594 = vsel %vm310, %v268, 0
      %v597 = vsel %vm310, %v269, 0
      %v600 = vsel %vm310, %v270, 0
      %v603 = vsel %vm310, %v271, 0
      %v606 = vsel %vm310, %v272, 0
      %v609 = vsel %vm310, %v273, 0
      %v612 = vsel %vm310, %v274, 0
      %v615 = vsel %vm310, %v275, 0
      %v618 = vsel %vm310, %v276, 0
      %v621 = vsel %vm310, %v277, 0
      %v624 = vsel %vm310, %v278, 0
      %v627 = vsel %vm310, %v279, 0
      %v630 = vsel %vm310, %v280, 0
      %v633 = vsel %vm310, %v281, 0
      %v636 = vsel %vm310, %v282, 0
      %v639 = vsel %vm310, %v283, 0
      %v642 = vsel %vm310, %v284, 0
      %v645 = vsel %vm310, %v285, 0
      %v648 = vsel %vm310, %v286, 0
      %v651 = vsel %vm310, %v287, 0
      %v654 = vsel %vm310, %v288, 0
      %v657 = vsel %vm310, %v289, 0
      %v660 = vsel %vm310, %v290, 0
      %v663 = vsel %vm310, %v291, 0
      %v666 = vsel %vm310, %v292, 0
      %v669 = vsel %vm310, %v293, 0
      %v672 = vsel %vm310, %v294, 0
      %v675 = vsel %vm310, %v295, 0
      %v678 = vsel %vm310, %v296, 0
      %v681 = vsel %vm310, %v297, 0
      %v684 = vsel %vm310, %v298, 0
      %v687 = vsel %vm310, %v299, 0
      %v690 = vsel %vm310, %v300, 0
      %v693 = vsel %vm310, %v301, 0
      %695 = vmatpush.msra.mxu0 0.0
      %696 = vmatpush.msra.mxu0 0.0
      %697 = vmatpush.msra.mxu0 0.0
      %698 = vmatpush.msra.mxu0 0.0
      %699 = vmatpush.msra.mxu0 0.0
      %700 = vmatpush.msra.mxu0 0.0
      %701 = vmatpush.msra.mxu0 0.0
      %702 = vmatpush.msra.mxu0 0.0
      %703 = vmatpush.msra.mxu0 0.0
      %704 = vmatpush.msra.mxu0 0.0
      %705 = vmatpush.msra.mxu0 0.0
      %706 = vmatpush.msra.mxu0 0.0
      %707 = vmatpush.msra.mxu0 %v305
      %708 = vmatpush.msra.mxu0 %v304
      %709 = vmatpush.msra.mxu0 %v303
      %710 = vmatpush.msra.mxu0 %v302
      %711 = vmatmul.f32.gmra.mxu0 %v312
      %v712 = vpop.f32.mrf.mxu0
      %v713 = vadd.f32 %v308, %v712
      %714 = vmatmul.f32.gmra.mxu0 %v315
      %v715 = vpop.f32.mrf.mxu0
      %v716 = vadd.f32 %v308, %v715
      %717 = vmatmul.f32.gmra.mxu0 %v318
      %v718 = vpop.f32.mrf.mxu0
      %v719 = vadd.f32 %v308, %v718
      %720 = vmatmul.f32.gmra.mxu0 %v321
      %v721 = vpop.f32.mrf.mxu0
      %v722 = vadd.f32 %v308, %v721
      %723 = vmatmul.f32.gmra.mxu0 %v324
      %v724 = vpop.f32.mrf.mxu0
      %v725 = vadd.f32 %v308, %v724
      %726 = vmatmul.f32.gmra.mxu0 %v327
      %v727 = vpop.f32.mrf.mxu0
      %v728 = vadd.f32 %v308, %v727
      %729 = vmatmul.f32.gmra.mxu0 %v330
      %v730 = vpop.f32.mrf.mxu0
      %v731 = vadd.f32 %v308, %v730
      %732 = vmatmul.f32.gmra.mxu0 %v333
      %v733 = vpop.f32.mrf.mxu0
      %v734 = vadd.f32 %v308, %v733
      %735 = vmatmul.f32.gmra.mxu0 %v336
      %v736 = vpop.f32.mrf.mxu0
      %v737 = vadd.f32 %v308, %v736
      %738 = vmatmul.f32.gmra.mxu0 %v339
      %v739 = vpop.f32.mrf.mxu0
      %v740 = vadd.f32 %v308, %v739
      %741 = vmatmul.f32.gmra.mxu0 %v342
      %v742 = vpop.f32.mrf.mxu0
      %v743 = vadd.f32 %v308, %v742
      %744 = vmatmul.f32.gmra.mxu0 %v345
      %v745 = vpop.f32.mrf.mxu0
      %v746 = vadd.f32 %v308, %v745
      %747 = vmatmul.f32.gmra.mxu0 %v348
      %v748 = vpop.f32.mrf.mxu0
      %v749 = vadd.f32 %v308, %v748
      %750 = vmatmul.f32.gmra.mxu0 %v351
      %v751 = vpop.f32.mrf.mxu0
      %v752 = vadd.f32 %v308, %v751
      %753 = vmatmul.f32.gmra.mxu0 %v354
      %v754 = vpop.f32.mrf.mxu0
      %v755 = vadd.f32 %v308, %v754
      %756 = vmatmul.f32.gmra.mxu0 %v357
      %v757 = vpop.f32.mrf.mxu0
      %v758 = vadd.f32 %v308, %v757
      %759 = vmatmul.f32.gmra.mxu0 %v360
      %v760 = vpop.f32.mrf.mxu0
      %v761 = vadd.f32 %v308, %v760
      %762 = vmatmul.f32.gmra.mxu0 %v363
      %v763 = vpop.f32.mrf.mxu0
      %v764 = vadd.f32 %v308, %v763
      %765 = vmatmul.f32.gmra.mxu0 %v366
      %v766 = vpop.f32.mrf.mxu0
      %v767 = vadd.f32 %v308, %v766
      %768 = vmatmul.f32.gmra.mxu0 %v369
      %v769 = vpop.f32.mrf.mxu0
      %v770 = vadd.f32 %v308, %v769
      %771 = vmatmul.f32.gmra.mxu0 %v372
      %v772 = vpop.f32.mrf.mxu0
      %v773 = vadd.f32 %v308, %v772
      %774 = vmatmul.f32.gmra.mxu0 %v375
      %v775 = vpop.f32.mrf.mxu0
      %v776 = vadd.f32 %v308, %v775
      %777 = vmatmul.f32.gmra.mxu0 %v378
      %v778 = vpop.f32.mrf.mxu0
      %v779 = vadd.f32 %v308, %v778
      %780 = vmatmul.f32.gmra.mxu0 %v381
      %v781 = vpop.f32.mrf.mxu0
      %v782 = vadd.f32 %v308, %v781
      %783 = vmatmul.f32.gmra.mxu0 %v384
      %v784 = vpop.f32.mrf.mxu0
      %v785 = vadd.f32 %v308, %v784
      %786 = vmatmul.f32.gmra.mxu0 %v387
      %v787 = vpop.f32.mrf.mxu0
      %v788 = vadd.f32 %v308, %v787
      %789 = vmatmul.f32.gmra.mxu0 %v390
      %v790 = vpop.f32.mrf.mxu0
      %v791 = vadd.f32 %v308, %v790
      %792 = vmatmul.f32.gmra.mxu0 %v393
      %v793 = vpop.f32.mrf.mxu0
      %v794 = vadd.f32 %v308, %v793
      %795 = vmatmul.f32.gmra.mxu0 %v396
      %v796 = vpop.f32.mrf.mxu0
      %v797 = vadd.f32 %v308, %v796
      %798 = vmatmul.f32.gmra.mxu0 %v399
      %v799 = vpop.f32.mrf.mxu0
      %v800 = vadd.f32 %v308, %v799
      %801 = vmatmul.f32.gmra.mxu0 %v402
      %v802 = vpop.f32.mrf.mxu0
      %v803 = vadd.f32 %v308, %v802
      %804 = vmatmul.f32.gmra.mxu0 %v405
      %v805 = vpop.f32.mrf.mxu0
      %v806 = vadd.f32 %v308, %v805
      %807 = vmatmul.f32.gmra.mxu0 %v408
      %v808 = vpop.f32.mrf.mxu0
      %v809 = vadd.f32 %v308, %v808
      %810 = vmatmul.f32.gmra.mxu0 %v411
      %v811 = vpop.f32.mrf.mxu0
      %v812 = vadd.f32 %v308, %v811
      %813 = vmatmul.f32.gmra.mxu0 %v414
      %v814 = vpop.f32.mrf.mxu0
      %v815 = vadd.f32 %v308, %v814
      %816 = vmatmul.f32.gmra.mxu0 %v417
      %v817 = vpop.f32.mrf.mxu0
      %v818 = vadd.f32 %v308, %v817
      %819 = vmatmul.f32.gmra.mxu0 %v420
      %v820 = vpop.f32.mrf.mxu0
      %v821 = vadd.f32 %v308, %v820
      %822 = vmatmul.f32.gmra.mxu0 %v423
      %v823 = vpop.f32.mrf.mxu0
      %v824 = vadd.f32 %v308, %v823
      %825 = vmatmul.f32.gmra.mxu0 %v426
      %v826 = vpop.f32.mrf.mxu0
      %v827 = vadd.f32 %v308, %v826
      %828 = vmatmul.f32.gmra.mxu0 %v429
      %v829 = vpop.f32.mrf.mxu0
      %v830 = vadd.f32 %v308, %v829
      %831 = vmatmul.f32.gmra.mxu0 %v432
      %v832 = vpop.f32.mrf.mxu0
      %v833 = vadd.f32 %v308, %v832
      %834 = vmatmul.f32.gmra.mxu0 %v435
      %v835 = vpop.f32.mrf.mxu0
      %v836 = vadd.f32 %v308, %v835
      %837 = vmatmul.f32.gmra.mxu0 %v438
      %v838 = vpop.f32.mrf.mxu0
      %v839 = vadd.f32 %v308, %v838
      %840 = vmatmul.f32.gmra.mxu0 %v441
      %v841 = vpop.f32.mrf.mxu0
      %v842 = vadd.f32 %v308, %v841
      %843 = vmatmul.f32.gmra.mxu0 %v444
      %v844 = vpop.f32.mrf.mxu0
      %v845 = vadd.f32 %v308, %v844
      %846 = vmatmul.f32.gmra.mxu0 %v447
      %v847 = vpop.f32.mrf.mxu0
      %v848 = vadd.f32 %v308, %v847
      %849 = vmatmul.f32.gmra.mxu0 %v450
      %v850 = vpop.f32.mrf.mxu0
      %v851 = vadd.f32 %v308, %v850
      %852 = vmatmul.f32.gmra.mxu0 %v453
      %v853 = vpop.f32.mrf.mxu0
      %v854 = vadd.f32 %v308, %v853
      %855 = vmatmul.f32.gmra.mxu0 %v456
      %v856 = vpop.f32.mrf.mxu0
      %v857 = vadd.f32 %v308, %v856
      %858 = vmatmul.f32.gmra.mxu0 %v459
      %v859 = vpop.f32.mrf.mxu0
      %v860 = vadd.f32 %v308, %v859
      %861 = vmatmul.f32.gmra.mxu0 %v462
      %v862 = vpop.f32.mrf.mxu0
      %v863 = vadd.f32 %v308, %v862
      %864 = vmatmul.f32.gmra.mxu0 %v465
      %v865 = vpop.f32.mrf.mxu0
      %v866 = vadd.f32 %v308, %v865
      %867 = vmatmul.f32.gmra.mxu0 %v468
      %v868 = vpop.f32.mrf.mxu0
      %v869 = vadd.f32 %v308, %v868
      %870 = vmatmul.f32.gmra.mxu0 %v471
      %v871 = vpop.f32.mrf.mxu0
      %v872 = vadd.f32 %v308, %v871
      %873 = vmatmul.f32.gmra.mxu0 %v474
      %v874 = vpop.f32.mrf.mxu0
      %v875 = vadd.f32 %v308, %v874
      %876 = vmatmul.f32.gmra.mxu0 %v477
      %v877 = vpop.f32.mrf.mxu0
      %v878 = vadd.f32 %v308, %v877
      %879 = vmatmul.f32.gmra.mxu0 %v480
      %v880 = vpop.f32.mrf.mxu0
      %v881 = vadd.f32 %v308, %v880
      %882 = vmatmul.f32.gmra.mxu0 %v483
      %v883 = vpop.f32.mrf.mxu0
      %v884 = vadd.f32 %v308, %v883
      %885 = vmatmul.f32.gmra.mxu0 %v486
      %v886 = vpop.f32.mrf.mxu0
      %v887 = vadd.f32 %v308, %v886
      %888 = vmatmul.f32.gmra.mxu0 %v489
      %v889 = vpop.f32.mrf.mxu0
      %v890 = vadd.f32 %v308, %v889
      %891 = vmatmul.f32.gmra.mxu0 %v492
      %v892 = vpop.f32.mrf.mxu0
      %v893 = vadd.f32 %v308, %v892
      %894 = vmatmul.f32.gmra.mxu0 %v495
      %v895 = vpop.f32.mrf.mxu0
      %v896 = vadd.f32 %v308, %v895
      %897 = vmatmul.f32.gmra.mxu0 %v498
      %v898 = vpop.f32.mrf.mxu0
      %v899 = vadd.f32 %v308, %v898
      %900 = vmatmul.f32.gmra.mxu0 %v501
      %v901 = vpop.f32.mrf.mxu0
      %v902 = vadd.f32 %v308, %v901
      %903 = vmatmul.f32.gmra.mxu0 %v504
      %v904 = vpop.f32.mrf.mxu0
      %v905 = vadd.f32 %v308, %v904
      %906 = vmatmul.f32.gmra.mxu0 %v507
      %v907 = vpop.f32.mrf.mxu0
      %v908 = vadd.f32 %v308, %v907
      %909 = vmatmul.f32.gmra.mxu0 %v510
      %v910 = vpop.f32.mrf.mxu0
      %v911 = vadd.f32 %v308, %v910
      %912 = vmatmul.f32.gmra.mxu0 %v513
      %v913 = vpop.f32.mrf.mxu0
      %v914 = vadd.f32 %v308, %v913
      %915 = vmatmul.f32.gmra.mxu0 %v516
      %v916 = vpop.f32.mrf.mxu0
      %v917 = vadd.f32 %v308, %v916
      %918 = vmatmul.f32.gmra.mxu0 %v519
      %v919 = vpop.f32.mrf.mxu0
      %v920 = vadd.f32 %v308, %v919
      %921 = vmatmul.f32.gmra.mxu0 %v522
      %v922 = vpop.f32.mrf.mxu0
      %v923 = vadd.f32 %v308, %v922
      %924 = vmatmul.f32.gmra.mxu0 %v525
      %v925 = vpop.f32.mrf.mxu0
      %v926 = vadd.f32 %v308, %v925
      %927 = vmatmul.f32.gmra.mxu0 %v528
      %v928 = vpop.f32.mrf.mxu0
      %v929 = vadd.f32 %v308, %v928
      %930 = vmatmul.f32.gmra.mxu0 %v531
      %v931 = vpop.f32.mrf.mxu0
      %v932 = vadd.f32 %v308, %v931
      %933 = vmatmul.f32.gmra.mxu0 %v534
      %v934 = vpop.f32.mrf.mxu0
      %v935 = vadd.f32 %v308, %v934
      %936 = vmatmul.f32.gmra.mxu0 %v537
      %v937 = vpop.f32.mrf.mxu0
      %v938 = vadd.f32 %v308, %v937
      %939 = vmatmul.f32.gmra.mxu0 %v540
      %v940 = vpop.f32.mrf.mxu0
      %v941 = vadd.f32 %v308, %v940
      %942 = vmatmul.f32.gmra.mxu0 %v543
      %v943 = vpop.f32.mrf.mxu0
      %v944 = vadd.f32 %v308, %v943
      %945 = vmatmul.f32.gmra.mxu0 %v546
      %v946 = vpop.f32.mrf.mxu0
      %v947 = vadd.f32 %v308, %v946
      %948 = vmatmul.f32.gmra.mxu0 %v549
      %v949 = vpop.f32.mrf.mxu0
      %v950 = vadd.f32 %v308, %v949
      %951 = vmatmul.f32.gmra.mxu0 %v552
      %v952 = vpop.f32.mrf.mxu0
      %v953 = vadd.f32 %v308, %v952
      %954 = vmatmul.f32.gmra.mxu0 %v555
      %v955 = vpop.f32.mrf.mxu0
      %v956 = vadd.f32 %v308, %v955
      %957 = vmatmul.f32.gmra.mxu0 %v558
      %v958 = vpop.f32.mrf.mxu0
      %v959 = vadd.f32 %v308, %v958
      %960 = vmatmul.f32.gmra.mxu0 %v561
      %v961 = vpop.f32.mrf.mxu0
      %v962 = vadd.f32 %v308, %v961
      %963 = vmatmul.f32.gmra.mxu0 %v564
      %v964 = vpop.f32.mrf.mxu0
      %v965 = vadd.f32 %v308, %v964
      %966 = vmatmul.f32.gmra.mxu0 %v567
      %v967 = vpop.f32.mrf.mxu0
      %v968 = vadd.f32 %v308, %v967
      %969 = vmatmul.f32.gmra.mxu0 %v570
      %v970 = vpop.f32.mrf.mxu0
      %v971 = vadd.f32 %v308, %v970
      %972 = vmatmul.f32.gmra.mxu0 %v573
      %v973 = vpop.f32.mrf.mxu0
      %v974 = vadd.f32 %v308, %v973
      %975 = vmatmul.f32.gmra.mxu0 %v576
      %v976 = vpop.f32.mrf.mxu0
      %v977 = vadd.f32 %v308, %v976
      %978 = vmatmul.f32.gmra.mxu0 %v579
      %v979 = vpop.f32.mrf.mxu0
      %v980 = vadd.f32 %v308, %v979
      %981 = vmatmul.f32.gmra.mxu0 %v582
      %v982 = vpop.f32.mrf.mxu0
      %v983 = vadd.f32 %v308, %v982
      %984 = vmatmul.f32.gmra.mxu0 %v585
      %v985 = vpop.f32.mrf.mxu0
      %v986 = vadd.f32 %v308, %v985
      %987 = vmatmul.f32.gmra.mxu0 %v588
      %v988 = vpop.f32.mrf.mxu0
      %v989 = vadd.f32 %v308, %v988
      %990 = vmatmul.f32.gmra.mxu0 %v591
      %v991 = vpop.f32.mrf.mxu0
      %v992 = vadd.f32 %v308, %v991
      %993 = vmatmul.f32.gmra.mxu0 %v594
      %v994 = vpop.f32.mrf.mxu0
      %v995 = vadd.f32 %v308, %v994
      %996 = vmatmul.f32.gmra.mxu0 %v597
      %v997 = vpop.f32.mrf.mxu0
      %v998 = vadd.f32 %v308, %v997
      %999 = vmatmul.f32.gmra.mxu0 %v600
      %v1000 = vpop.f32.mrf.mxu0
      %v1001 = vadd.f32 %v308, %v1000
      %1002 = vmatmul.f32.gmra.mxu0 %v603
      %v1003 = vpop.f32.mrf.mxu0
      %v1004 = vadd.f32 %v308, %v1003
      %1005 = vmatmul.f32.gmra.mxu0 %v606
      %v1006 = vpop.f32.mrf.mxu0
      %v1007 = vadd.f32 %v308, %v1006
      %1008 = vmatmul.f32.gmra.mxu0 %v609
      %v1009 = vpop.f32.mrf.mxu0
      %v1010 = vadd.f32 %v308, %v1009
      %1011 = vmatmul.f32.gmra.mxu0 %v612
      %v1012 = vpop.f32.mrf.mxu0
      %v1013 = vadd.f32 %v308, %v1012
      %1014 = vmatmul.f32.gmra.mxu0 %v615
      %v1015 = vpop.f32.mrf.mxu0
      %v1016 = vadd.f32 %v308, %v1015
      %1017 = vmatmul.f32.gmra.mxu0 %v618
      %v1018 = vpop.f32.mrf.mxu0
      %v1019 = vadd.f32 %v308, %v1018
      %1020 = vmatmul.f32.gmra.mxu0 %v621
      %v1021 = vpop.f32.mrf.mxu0
      %v1022 = vadd.f32 %v308, %v1021
      %1023 = vmatmul.f32.gmra.mxu0 %v624
      %v1024 = vpop.f32.mrf.mxu0
      %v1025 = vadd.f32 %v308, %v1024
      %1026 = vmatmul.f32.gmra.mxu0 %v627
      %v1027 = vpop.f32.mrf.mxu0
      %v1028 = vadd.f32 %v308, %v1027
      %1029 = vmatmul.f32.gmra.mxu0 %v630
      %v1030 = vpop.f32.mrf.mxu0
      %v1031 = vadd.f32 %v308, %v1030
      %1032 = vmatmul.f32.gmra.mxu0 %v633
      %v1033 = vpop.f32.mrf.mxu0
      %v1034 = vadd.f32 %v308, %v1033
      %1035 = vmatmul.f32.gmra.mxu0 %v636
      %v1036 = vpop.f32.mrf.mxu0
      %v1037 = vadd.f32 %v308, %v1036
      %1038 = vmatmul.f32.gmra.mxu0 %v639
      %v1039 = vpop.f32.mrf.mxu0
      %v1040 = vadd.f32 %v308, %v1039
      %1041 = vmatmul.f32.gmra.mxu0 %v642
      %v1042 = vpop.f32.mrf.mxu0
      %v1043 = vadd.f32 %v308, %v1042
      %1044 = vmatmul.f32.gmra.mxu0 %v645
      %v1045 = vpop.f32.mrf.mxu0
      %v1046 = vadd.f32 %v308, %v1045
      %1047 = vmatmul.f32.gmra.mxu0 %v648
      %v1048 = vpop.f32.mrf.mxu0
      %v1049 = vadd.f32 %v308, %v1048
      %1050 = vmatmul.f32.gmra.mxu0 %v651
      %v1051 = vpop.f32.mrf.mxu0
      %v1052 = vadd.f32 %v308, %v1051
      %1053 = vmatmul.f32.gmra.mxu0 %v654
      %v1054 = vpop.f32.mrf.mxu0
      %v1055 = vadd.f32 %v308, %v1054
      %1056 = vmatmul.f32.gmra.mxu0 %v657
      %v1057 = vpop.f32.mrf.mxu0
      %v1058 = vadd.f32 %v308, %v1057
      %1059 = vmatmul.f32.gmra.mxu0 %v660
      %v1060 = vpop.f32.mrf.mxu0
      %v1061 = vadd.f32 %v308, %v1060
      %1062 = vmatmul.f32.gmra.mxu0 %v663
      %v1063 = vpop.f32.mrf.mxu0
      %v1064 = vadd.f32 %v308, %v1063
      %1065 = vmatmul.f32.gmra.mxu0 %v666
      %v1066 = vpop.f32.mrf.mxu0
      %v1067 = vadd.f32 %v308, %v1066
      %1068 = vmatmul.f32.gmra.mxu0 %v669
      %v1069 = vpop.f32.mrf.mxu0
      %v1070 = vadd.f32 %v308, %v1069
      %1071 = vmatmul.f32.gmra.mxu0 %v672
      %v1072 = vpop.f32.mrf.mxu0
      %v1073 = vadd.f32 %v308, %v1072
      %1074 = vmatmul.f32.gmra.mxu0 %v675
      %v1075 = vpop.f32.mrf.mxu0
      %v1076 = vadd.f32 %v308, %v1075
      %1077 = vmatmul.f32.gmra.mxu0 %v678
      %v1078 = vpop.f32.mrf.mxu0
      %v1079 = vadd.f32 %v308, %v1078
      %1080 = vmatmul.f32.gmra.mxu0 %v681
      %v1081 = vpop.f32.mrf.mxu0
      %v1082 = vadd.f32 %v308, %v1081
      %1083 = vmatmul.f32.gmra.mxu0 %v684
      %v1084 = vpop.f32.mrf.mxu0
      %v1085 = vadd.f32 %v308, %v1084
      %1086 = vmatmul.f32.gmra.mxu0 %v687
      %v1087 = vpop.f32.mrf.mxu0
      %v1088 = vadd.f32 %v308, %v1087
      %1089 = vmatmul.f32.gmra.mxu0 %v690
      %v1090 = vpop.f32.mrf.mxu0
      %v1091 = vadd.f32 %v308, %v1090
      %1092 = vmatmul.f32.gmra.mxu0 %v693
      %v1093 = vpop.f32.mrf.mxu0
      %v1094 = vadd.f32 %v308, %v1093
      %1095 = vdwg.mxu0
      %v1096 = vmax.f32 %v713, 0.0
      %v1097 = vmax.f32 %v716, 0.0
      %v1098 = vmax.f32 %v719, 0.0
      %v1099 = vmax.f32 %v722, 0.0
      %v1100 = vmax.f32 %v725, 0.0
      %v1101 = vmax.f32 %v728, 0.0
      %v1102 = vmax.f32 %v731, 0.0
      %v1103 = vmax.f32 %v734, 0.0
      %v1104 = vmax.f32 %v737, 0.0
      %v1105 = vmax.f32 %v740, 0.0
      %v1106 = vmax.f32 %v743, 0.0
      %v1107 = vmax.f32 %v746, 0.0
      %v1108 = vmax.f32 %v749, 0.0
      %v1109 = vmax.f32 %v752, 0.0
      %v1110 = vmax.f32 %v755, 0.0
      %v1111 = vmax.f32 %v758, 0.0
      %v1112 = vmax.f32 %v761, 0.0
      %v1113 = vmax.f32 %v764, 0.0
      %v1114 = vmax.f32 %v767, 0.0
      %v1115 = vmax.f32 %v770, 0.0
      %v1116 = vmax.f32 %v773, 0.0
      %v1117 = vmax.f32 %v776, 0.0
      %v1118 = vmax.f32 %v779, 0.0
      %v1119 = vmax.f32 %v782, 0.0
      %v1120 = vmax.f32 %v785, 0.0
      %v1121 = vmax.f32 %v788, 0.0
      %v1122 = vmax.f32 %v791, 0.0
      %v1123 = vmax.f32 %v794, 0.0
      %v1124 = vmax.f32 %v797, 0.0
      %v1125 = vmax.f32 %v800, 0.0
      %v1126 = vmax.f32 %v803, 0.0
      %v1127 = vmax.f32 %v806, 0.0
      %v1128 = vmax.f32 %v809, 0.0
      %v1129 = vmax.f32 %v812, 0.0
      %v1130 = vmax.f32 %v815, 0.0
      %v1131 = vmax.f32 %v818, 0.0
      %v1132 = vmax.f32 %v821, 0.0
      %v1133 = vmax.f32 %v824, 0.0
      %v1134 = vmax.f32 %v827, 0.0
      %v1135 = vmax.f32 %v830, 0.0
      %v1136 = vmax.f32 %v833, 0.0
      %v1137 = vmax.f32 %v836, 0.0
      %v1138 = vmax.f32 %v839, 0.0
      %v1139 = vmax.f32 %v842, 0.0
      %v1140 = vmax.f32 %v845, 0.0
      %v1141 = vmax.f32 %v848, 0.0
      %v1142 = vmax.f32 %v851, 0.0
      %v1143 = vmax.f32 %v854, 0.0
      %v1144 = vmax.f32 %v857, 0.0
      %v1145 = vmax.f32 %v860, 0.0
      %v1146 = vmax.f32 %v863, 0.0
      %v1147 = vmax.f32 %v866, 0.0
      %v1148 = vmax.f32 %v869, 0.0
      %v1149 = vmax.f32 %v872, 0.0
      %v1150 = vmax.f32 %v875, 0.0
      %v1151 = vmax.f32 %v878, 0.0
      %v1152 = vmax.f32 %v881, 0.0
      %v1153 = vmax.f32 %v884, 0.0
      %v1154 = vmax.f32 %v887, 0.0
      %v1155 = vmax.f32 %v890, 0.0
      %v1156 = vmax.f32 %v893, 0.0
      %v1157 = vmax.f32 %v896, 0.0
      %v1158 = vmax.f32 %v899, 0.0
      %v1159 = vmax.f32 %v902, 0.0
      %v1160 = vmax.f32 %v905, 0.0
      %v1161 = vmax.f32 %v908, 0.0
      %v1162 = vmax.f32 %v911, 0.0
      %v1163 = vmax.f32 %v914, 0.0
      %v1164 = vmax.f32 %v917, 0.0
      %v1165 = vmax.f32 %v920, 0.0
      %v1166 = vmax.f32 %v923, 0.0
      %v1167 = vmax.f32 %v926, 0.0
      %v1168 = vmax.f32 %v929, 0.0
      %v1169 = vmax.f32 %v932, 0.0
      %v1170 = vmax.f32 %v935, 0.0
      %v1171 = vmax.f32 %v938, 0.0
      %v1172 = vmax.f32 %v941, 0.0
      %v1173 = vmax.f32 %v944, 0.0
      %v1174 = vmax.f32 %v947, 0.0
      %v1175 = vmax.f32 %v950, 0.0
      %v1176 = vmax.f32 %v953, 0.0
      %v1177 = vmax.f32 %v956, 0.0
      %v1178 = vmax.f32 %v959, 0.0
      %v1179 = vmax.f32 %v962, 0.0
      %v1180 = vmax.f32 %v965, 0.0
      %v1181 = vmax.f32 %v968, 0.0
      %v1182 = vmax.f32 %v971, 0.0
      %v1183 = vmax.f32 %v974, 0.0
      %v1184 = vmax.f32 %v977, 0.0
      %v1185 = vmax.f32 %v980, 0.0
      %v1186 = vmax.f32 %v983, 0.0
      %v1187 = vmax.f32 %v986, 0.0
      %v1188 = vmax.f32 %v989, 0.0
      %v1189 = vmax.f32 %v992, 0.0
      %v1190 = vmax.f32 %v995, 0.0
      %v1191 = vmax.f32 %v998, 0.0
      %v1192 = vmax.f32 %v1001, 0.0
      %v1193 = vmax.f32 %v1004, 0.0
      %v1194 = vmax.f32 %v1007, 0.0
      %v1195 = vmax.f32 %v1010, 0.0
      %v1196 = vmax.f32 %v1013, 0.0
      %v1197 = vmax.f32 %v1016, 0.0
      %v1198 = vmax.f32 %v1019, 0.0
      %v1199 = vmax.f32 %v1022, 0.0
      %v1200 = vmax.f32 %v1025, 0.0
      %v1201 = vmax.f32 %v1028, 0.0
      %v1202 = vmax.f32 %v1031, 0.0
      %v1203 = vmax.f32 %v1034, 0.0
      %v1204 = vmax.f32 %v1037, 0.0
      %v1205 = vmax.f32 %v1040, 0.0
      %v1206 = vmax.f32 %v1043, 0.0
      %v1207 = vmax.f32 %v1046, 0.0
      %v1208 = vmax.f32 %v1049, 0.0
      %v1209 = vmax.f32 %v1052, 0.0
      %v1210 = vmax.f32 %v1055, 0.0
      %v1211 = vmax.f32 %v1058, 0.0
      %v1212 = vmax.f32 %v1061, 0.0
      %v1213 = vmax.f32 %v1064, 0.0
      %v1214 = vmax.f32 %v1067, 0.0
      %v1215 = vmax.f32 %v1070, 0.0
      %v1216 = vmax.f32 %v1073, 0.0
      %v1217 = vmax.f32 %v1076, 0.0
      %v1218 = vmax.f32 %v1079, 0.0
      %v1219 = vmax.f32 %v1082, 0.0
      %v1220 = vmax.f32 %v1085, 0.0
      %v1221 = vmax.f32 %v1088, 0.0
      %v1222 = vmax.f32 %v1091, 0.0
      %v1223 = vmax.f32 %v1094, 0.0
      %1224 = vst [vmem:[%s172] sm:$0xff] %v1096
      %1225 = vst [vmem:[%s172 + $0x8] sm:$0xff] %v1097
      %1226 = vst [vmem:[%s172 + $0x10] sm:$0xff] %v1098
      %1227 = vst [vmem:[%s172 + $0x18] sm:$0xff] %v1099
      %1228 = vst [vmem:[%s172 + $0x20] sm:$0xff] %v1100
      %1229 = vst [vmem:[%s172 + $0x28] sm:$0xff] %v1101
      %1230 = vst [vmem:[%s172 + $0x30] sm:$0xff] %v1102
      %1231 = vst [vmem:[%s172 + $0x38] sm:$0xff] %v1103
      %1232 = vst [vmem:[%s172 + $0x40] sm:$0xff] %v1104
      %1233 = vst [vmem:[%s172 + $0x48] sm:$0xff] %v1105
      %1234 = vst [vmem:[%s172 + $0x50] sm:$0xff] %v1106
      %1235 = vst [vmem:[%s172 + $0x58] sm:$0xff] %v1107
      %1236 = vst [vmem:[%s172 + $0x60] sm:$0xff] %v1108
      %1237 = vst [vmem:[%s172 + $0x68] sm:$0xff] %v1109
      %1238 = vst [vmem:[%s172 + $0x70] sm:$0xff] %v1110
      %1239 = vst [vmem:[%s172 + $0x78] sm:$0xff] %v1111
      %1240 = vst [vmem:[%s172 + $0x80] sm:$0xff] %v1112
      %1241 = vst [vmem:[%s172 + $0x88] sm:$0xff] %v1113
      %1242 = vst [vmem:[%s172 + $0x90] sm:$0xff] %v1114
      %1243 = vst [vmem:[%s172 + $0x98] sm:$0xff] %v1115
      %1244 = vst [vmem:[%s172 + $0xa0] sm:$0xff] %v1116
      %1245 = vst [vmem:[%s172 + $0xa8] sm:$0xff] %v1117
      %1246 = vst [vmem:[%s172 + $0xb0] sm:$0xff] %v1118
      %1247 = vst [vmem:[%s172 + $0xb8] sm:$0xff] %v1119
      %1248 = vst [vmem:[%s172 + $0xc0] sm:$0xff] %v1120
      %1249 = vst [vmem:[%s172 + $0xc8] sm:$0xff] %v1121
      %1250 = vst [vmem:[%s172 + $0xd0] sm:$0xff] %v1122
      %1251 = vst [vmem:[%s172 + $0xd8] sm:$0xff] %v1123
      %1252 = vst [vmem:[%s172 + $0xe0] sm:$0xff] %v1124
      %1253 = vst [vmem:[%s172 + $0xe8] sm:$0xff] %v1125
      %1254 = vst [vmem:[%s172 + $0xf0] sm:$0xff] %v1126
      %1255 = vst [vmem:[%s172 + $0xf8] sm:$0xff] %v1127
      %1256 = vst [vmem:[%s172 + $0x100] sm:$0xff] %v1128
      %1257 = vst [vmem:[%s172 + $0x108] sm:$0xff] %v1129
      %1258 = vst [vmem:[%s172 + $0x110] sm:$0xff] %v1130
      %1259 = vst [vmem:[%s172 + $0x118] sm:$0xff] %v1131
      %1260 = vst [vmem:[%s172 + $0x120] sm:$0xff] %v1132
      %1261 = vst [vmem:[%s172 + $0x128] sm:$0xff] %v1133
      %1262 = vst [vmem:[%s172 + $0x130] sm:$0xff] %v1134
      %1263 = vst [vmem:[%s172 + $0x138] sm:$0xff] %v1135
      %1264 = vst [vmem:[%s172 + $0x140] sm:$0xff] %v1136
      %1265 = vst [vmem:[%s172 + $0x148] sm:$0xff] %v1137
      %1266 = vst [vmem:[%s172 + $0x150] sm:$0xff] %v1138
      %1267 = vst [vmem:[%s172 + $0x158] sm:$0xff] %v1139
      %1268 = vst [vmem:[%s172 + $0x160] sm:$0xff] %v1140
      %1269 = vst [vmem:[%s172 + $0x168] sm:$0xff] %v1141
      %1270 = vst [vmem:[%s172 + $0x170] sm:$0xff] %v1142
      %1271 = vst [vmem:[%s172 + $0x178] sm:$0xff] %v1143
      %1272 = vst [vmem:[%s172 + $0x180] sm:$0xff] %v1144
      %1273 = vst [vmem:[%s172 + $0x188] sm:$0xff] %v1145
      %1274 = vst [vmem:[%s172 + $0x190] sm:$0xff] %v1146
      %1275 = vst [vmem:[%s172 + $0x198] sm:$0xff] %v1147
      %1276 = vst [vmem:[%s172 + $0x1a0] sm:$0xff] %v1148
      %1277 = vst [vmem:[%s172 + $0x1a8] sm:$0xff] %v1149
      %1278 = vst [vmem:[%s172 + $0x1b0] sm:$0xff] %v1150
      %1279 = vst [vmem:[%s172 + $0x1b8] sm:$0xff] %v1151
      %1280 = vst [vmem:[%s172 + $0x1c0] sm:$0xff] %v1152
      %1281 = vst [vmem:[%s172 + $0x1c8] sm:$0xff] %v1153
      %1282 = vst [vmem:[%s172 + $0x1d0] sm:$0xff] %v1154
      %1283 = vst [vmem:[%s172 + $0x1d8] sm:$0xff] %v1155
      %1284 = vst [vmem:[%s172 + $0x1e0] sm:$0xff] %v1156
      %1285 = vst [vmem:[%s172 + $0x1e8] sm:$0xff] %v1157
      %1286 = vst [vmem:[%s172 + $0x1f0] sm:$0xff] %v1158
      %1287 = vst [vmem:[%s172 + $0x1f8] sm:$0xff] %v1159
      %1288 = vst [vmem:[%s172 + $0x200] sm:$0xff] %v1160
      %1289 = vst [vmem:[%s172 + $0x208] sm:$0xff] %v1161
      %1290 = vst [vmem:[%s172 + $0x210] sm:$0xff] %v1162
      %1291 = vst [vmem:[%s172 + $0x218] sm:$0xff] %v1163
      %1292 = vst [vmem:[%s172 + $0x220] sm:$0xff] %v1164
      %1293 = vst [vmem:[%s172 + $0x228] sm:$0xff] %v1165
      %1294 = vst [vmem:[%s172 + $0x230] sm:$0xff] %v1166
      %1295 = vst [vmem:[%s172 + $0x238] sm:$0xff] %v1167
      %1296 = vst [vmem:[%s172 + $0x240] sm:$0xff] %v1168
      %1297 = vst [vmem:[%s172 + $0x248] sm:$0xff] %v1169
      %1298 = vst [vmem:[%s172 + $0x250] sm:$0xff] %v1170
      %1299 = vst [vmem:[%s172 + $0x258] sm:$0xff] %v1171
      %1300 = vst [vmem:[%s172 + $0x260] sm:$0xff] %v1172
      %1301 = vst [vmem:[%s172 + $0x268] sm:$0xff] %v1173
      %1302 = vst [vmem:[%s172 + $0x270] sm:$0xff] %v1174
      %1303 = vst [vmem:[%s172 + $0x278] sm:$0xff] %v1175
      %1304 = vst [vmem:[%s172 + $0x280] sm:$0xff] %v1176
      %1305 = vst [vmem:[%s172 + $0x288] sm:$0xff] %v1177
      %1306 = vst [vmem:[%s172 + $0x290] sm:$0xff] %v1178
      %1307 = vst [vmem:[%s172 + $0x298] sm:$0xff] %v1179
      %1308 = vst [vmem:[%s172 + $0x2a0] sm:$0xff] %v1180
      %1309 = vst [vmem:[%s172 + $0x2a8] sm:$0xff] %v1181
      %1310 = vst [vmem:[%s172 + $0x2b0] sm:$0xff] %v1182
      %1311 = vst [vmem:[%s172 + $0x2b8] sm:$0xff] %v1183
      %1312 = vst [vmem:[%s172 + $0x2c0] sm:$0xff] %v1184
      %1313 = vst [vmem:[%s172 + $0x2c8] sm:$0xff] %v1185
      %1314 = vst [vmem:[%s172 + $0x2d0] sm:$0xff] %v1186
      %1315 = vst [vmem:[%s172 + $0x2d8] sm:$0xff] %v1187
      %1316 = vst [vmem:[%s172 + $0x2e0] sm:$0xff] %v1188
      %1317 = vst [vmem:[%s172 + $0x2e8] sm:$0xff] %v1189
      %1318 = vst [vmem:[%s172 + $0x2f0] sm:$0xff] %v1190
      %1319 = vst [vmem:[%s172 + $0x2f8] sm:$0xff] %v1191
      %1320 = vst [vmem:[%s172 + $0x300] sm:$0xff] %v1192
      %1321 = vst [vmem:[%s172 + $0x308] sm:$0xff] %v1193
      %1322 = vst [vmem:[%s172 + $0x310] sm:$0xff] %v1194
      %1323 = vst [vmem:[%s172 + $0x318] sm:$0xff] %v1195
      %1324 = vst [vmem:[%s172 + $0x320] sm:$0xff] %v1196
      %1325 = vst [vmem:[%s172 + $0x328] sm:$0xff] %v1197
      %1326 = vst [vmem:[%s172 + $0x330] sm:$0xff] %v1198
      %1327 = vst [vmem:[%s172 + $0x338] sm:$0xff] %v1199
      %1328 = vst [vmem:[%s172 + $0x340] sm:$0xff] %v1200
      %1329 = vst [vmem:[%s172 + $0x348] sm:$0xff] %v1201
      %1330 = vst [vmem:[%s172 + $0x350] sm:$0xff] %v1202
      %1331 = vst [vmem:[%s172 + $0x358] sm:$0xff] %v1203
      %1332 = vst [vmem:[%s172 + $0x360] sm:$0xff] %v1204
      %1333 = vst [vmem:[%s172 + $0x368] sm:$0xff] %v1205
      %1334 = vst [vmem:[%s172 + $0x370] sm:$0xff] %v1206
      %1335 = vst [vmem:[%s172 + $0x378] sm:$0xff] %v1207
      %1336 = vst [vmem:[%s172 + $0x380] sm:$0xff] %v1208
      %1337 = vst [vmem:[%s172 + $0x388] sm:$0xff] %v1209
      %1338 = vst [vmem:[%s172 + $0x390] sm:$0xff] %v1210
      %1339 = vst [vmem:[%s172 + $0x398] sm:$0xff] %v1211
      %1340 = vst [vmem:[%s172 + $0x3a0] sm:$0xff] %v1212
      %1341 = vst [vmem:[%s172 + $0x3a8] sm:$0xff] %v1213
      %1342 = vst [vmem:[%s172 + $0x3b0] sm:$0xff] %v1214
      %1343 = vst [vmem:[%s172 + $0x3b8] sm:$0xff] %v1215
      %1344 = vst [vmem:[%s172 + $0x3c0] sm:$0xff] %v1216
      %1345 = vst [vmem:[%s172 + $0x3c8] sm:$0xff] %v1217
      %1346 = vst [vmem:[%s172 + $0x3d0] sm:$0xff] %v1218
      %1347 = vst [vmem:[%s172 + $0x3d8] sm:$0xff] %v1219
      %1348 = vst [vmem:[%s172 + $0x3e0] sm:$0xff] %v1220
      %1349 = vst [vmem:[%s172 + $0x3e8] sm:$0xff] %v1221
      %1350 = vst [vmem:[%s172 + $0x3f0] sm:$0xff] %v1222
      %1351 = vst [vmem:[%s172 + $0x3f8] sm:$0xff] %v1223
      %s1352 = smul.u32 128, %s14
      %p1353 = scmp.lt.s32.totalorder %s1352, 1023
      %s1354 = scalar_select %p1353, %s1352, 1023
      %s1355 = smul.addr %s1354, 8
      %s1356 = scalar_lea.vmem %s3, %s1355
      // Predicated region
      $region33: #{_deconv3d_block_impl.1} parent=31 // pred_check
        %p1357 = pneg %p100
      $region34: #{_deconv3d_block_impl.1} parent=31 // pred_check_branch
        %1359 = sbr.rel (%p1357) target = $region36
      $region35: #{_deconv3d_block_impl.1} parent=31 // pred_region
        %s1360 = smul.u32 128, %s14
      $region36: #{_deconv3d_block_impl.1} parent=31 // pred_fallthru
        _
    $region32: #{_deconv3d_block_impl.1} parent=5 // pred_fallthru
      _
    %p1361 = scmp.le.s32.totalorder 2, %s9
    // Predicated region
    $region37: #{_deconv3d_block_impl.1} parent=5 // pred_check
      %p1362 = pneg %p1361
    $region38: #{_deconv3d_block_impl.1} parent=5 // pred_check_branch
      %1364 = sbr.rel (%p1362) target = $region40
    $region39: #{_deconv3d_block_impl.1} parent=5 // pred_region
      %s1365 = ssub.s32 %s9, 2
      // Predicated region
      $region41: #{_deconv3d_block_impl.1} parent=39 // pred_check
        %p1366 = pneg %p106
      $region42: #{_deconv3d_block_impl.1} parent=39 // pred_check_branch
        %1368 = sbr.rel (%p1366) target = $region44
      $region43: #{_deconv3d_block_impl.1} parent=39 // pred_region
        %s1369 = smul.u32 128, %s15
        %p1370 = scmp.lt.s32.totalorder %s1369, 1023
        %s1371 = scalar_select %p1370, %s1369, 1023
        %s1372 = smul.addr %s1371, 8
        %s1373 = scalar_lea.vmem %s3, %s1372
      $region44: #{_deconv3d_block_impl.1} parent=39 // pred_fallthru
        _
    $region40: #{_deconv3d_block_impl.1} parent=5 // pred_fallthru
      _
  $region6: #{_deconv3d_block_impl.1} parent=0 // loop_footer
    %s13 = sadd.s32 1, %s9
  $region7: #{_deconv3d_block_impl.1} parent=0 // loop_footer_branch
    %8 = sbr.rel target = $region3
  $region8: #{_deconv3d_block_impl.1} parent=0 // loop_exit
    _

</llo_original>
